<compile_context>
chip_gen: v5e
topology: v5e:2x2
jax: 0.10.0
libtpu: 0.0.40
codegen_flags: <defaults>
</compile_context>

<pallas_src>
import jax
import jax.numpy as jnp
from jax.experimental import pallas as pl
from jax.experimental.pallas import tpu as pltpu


def _pow_gamma(base, gamma):
    """(1-pt)**gamma. Small integer gamma is unrolled into VPU multiplies
    (matches PyTorch pow semantics for integer-valued exponents, incl. negative
    bases) and avoids the exp(g*log(x)) EUP pair of a float pow."""
    g = float(gamma)
    if g.is_integer() and 0 <= int(g) <= 8:
        n = int(g)
        if n == 0:
            return jnp.ones_like(base)
        out = base
        for _ in range(n - 1):
            out = out * base
        return out
    return jnp.power(base, jnp.float32(g))


def _make_kernel(gamma, hw, tile_hw, num_channels, class_index_target):
    gamma = float(gamma)
    hw = int(hw)
    tile_hw = int(tile_hw)
    num_channels = int(num_channels)

    def focal_loss_kernel(x_ref, t_ref, out_ref):
        j = pl.program_id(1)

        x = x_ref[...].astype(jnp.float32)                      # (C, tile)

        if class_index_target:
            # rebuild the one-hot target in-kernel from int32 class indices:
            # (1, tile) int32 vs channel iota on the sublane axis.
            cls = t_ref[...]                                    # (1, tile) int32
            chan = jax.lax.broadcasted_iota(
                jnp.int32, (num_channels, tile_hw), 0)          # (C, tile)
            t = (chan == cls).astype(jnp.float32)               # (C, tile)
        else:
            t = t_ref[...].astype(jnp.float32)                  # (C, tile)

        # per-pixel L2 normalize over the channel (sublane) axis
        sum_sq = jnp.sum(x * x, axis=0, keepdims=True)          # (1, tile)
        inv_norm = jax.lax.rsqrt(sum_sq)                        # EUP rsqrt
        p = x * inv_norm                                        # VPU mul

        # pt = t*p + (1-t)*(1-p)  ==  (1-t) + (2t-1)*p  (exact identity, any t)
        pt = (1.0 - t) + (2.0 * t - 1.0) * p
        log_pt = jnp.log(pt)
        loss = -_pow_gamma(1.0 - pt, gamma) * log_pt

        # NaN/Inf -> 0 (as in the PyTorch code) and mask padded spatial columns
        # of a ragged last tile.  Mask MUST be applied before the block reduce.
        col = jax.lax.broadcasted_iota(jnp.int32, loss.shape, 1)
        valid = (j * tile_hw + col) < hw
        keep = valid & jnp.logical_not(jnp.isnan(loss) | jnp.isinf(loss))
        loss = jnp.where(keep, loss, 0.0)

        # one cross-lane reduce per (large) block; the partial sum goes to its
        # own full (8,128) output tile so there is no carried state and both
        # grid axes stay "parallel".
        out_ref[...] = jnp.full((8, 128), jnp.sum(loss), dtype=jnp.float32)

    return focal_loss_kernel


def _padded_block_bytes(rows, tile, dtype):
    """VMEM footprint of one (rows, tile) input block, including sublane
    padding (8 sublanes per 32-bit word; sub-32-bit dtypes pack along
    sublanes, so the padded sublane count is 8 * (4 // itemsize))."""
    itemsize = jnp.dtype(dtype).itemsize
    pack = max(1, 4 // itemsize)
    sub = 8 * pack
    rows_pad = -(-int(rows) // sub) * sub
    return rows_pad * int(tile) * itemsize


def focal_loss_2d(x, target, gamma=2.0, weight=None, size_average=True,
                  tile_hw=131072, cast_to_bf16=True):
    """x: (B, C, H, W) float array.
    target: either one-hot / soft targets of shape (B, C, H, W), or integer
    per-pixel class indices of shape (B, H, W) or (B, 1, H, W).
    Returns scalar focal loss (f32)."""
    if weight is not None:
        # TODO(synk): per-class weight rescaling not implemented.
        raise NotImplementedError("FocalLoss2d weight path not implemented")

    B, C, H, W = x.shape
    HW = H * W

    # channel-major views: free reshape, no transpose, no full-array padding
    xr = x.reshape(B, C, HW)
    if cast_to_bf16 and jnp.issubdtype(xr.dtype, jnp.floating) \
            and jnp.dtype(xr.dtype).itemsize > 2:
        xr = xr.astype(jnp.bfloat16)          # halves x HBM traffic

    class_index_target = jnp.issubdtype(target.dtype, jnp.integer) and \
        target.shape != x.shape
    if class_index_target:
        tr = target.reshape(B, 1, HW).astype(jnp.int32)     # 4 B/pixel
        t_rows = 1
    else:
        assert target.shape == x.shape, "one-hot target must match x shape"
        tr = target.reshape(B, C, HW)
        if cast_to_bf16 and jnp.issubdtype(tr.dtype, jnp.floating) \
                and jnp.dtype(tr.dtype).itemsize > 2:
            tr = tr.astype(jnp.bfloat16)      # 0/1 exact in bf16
        t_rows = C

    # spatial tile: multiple of 128 lanes, clamped to the rounded-up extent
    padded_hw = ((HW + 127) // 128) * 128
    tile = max(128, min((int(tile_hw) // 128) * 128, padded_hw))

    # budget double-buffered inputs (with sublane padding) at ~40 MiB so the
    # pipeline stays double-buffered even on v7x's 64 MiB physical VMEM.
    VMEM_INPUT_BUDGET = 40 * (1 << 20)

    def input_footprint(t):
        return 2 * (_padded_block_bytes(C, t, xr.dtype)
                    + _padded_block_bytes(t_rows, t, tr.dtype))

    while tile > 128 and input_footprint(tile) > VMEM_INPUT_BUDGET:
        tile = max(128, ((tile // 2) // 128) * 128)

    # v7x has 2 TensorCores/chip: when B == 1 make sure the (parallel) spatial
    # axis has >= 2 blocks so both cores get work (no-op on v5e/v6e).
    if B == 1 and padded_hw >= 256 and tile >= padded_hw:
        tile = -(-(padded_hw // 2) // 128) * 128

    grid_j = pl.cdiv(HW, tile)

    # explicit scoped-VMEM limit sized to the real padded footprint (scoped
    # defaults: 16 MiB v5e, 32 MiB v6e/v7x would otherwise cap the tile).
    vmem_limit = int(min(60 * (1 << 20),
                         max(24 * (1 << 20),
                             input_footprint(tile) + 8 * (1 << 20))))

    kernel = _make_kernel(gamma, HW, tile, C, class_index_target)

    t_block = (None, t_rows, tile) if class_index_target else (None, C, tile)

    partials = pl.pallas_call(
        kernel,
        out_shape=jax.ShapeDtypeStruct((B * 8, grid_j * 128), jnp.float32),
        grid_spec=pltpu.PrefetchScalarGridSpec(
            num_scalar_prefetch=0,
            grid=(B, grid_j),
            in_specs=[
                pl.BlockSpec((None, C, tile), lambda b, j: (b, 0, j)),
                pl.BlockSpec(t_block, lambda b, j: (b, 0, j)),
            ],
            out_specs=pl.BlockSpec((8, 128), lambda b, j: (b, j)),
        ),
        compiler_params=pltpu.CompilerParams(
            dimension_semantics=("parallel", "parallel"),
            vmem_limit_bytes=vmem_limit,
        ),
    )(xr, tr)

    # each (b, j) block's partial sum sits at the [0, 0] corner of its tile
    per_block = partials.reshape(B, 8, grid_j, 128)[:, 0, :, 0]
    total = jnp.sum(per_block)
    if size_average:
        return total / jnp.float32(B * HW)
    return total


def _reference(x, target, gamma=2.0, size_average=True):
    """Pure-JAX f32 port of the PyTorch forward (NCHW -> (N, C) rows)."""
    B, C, H, W = x.shape
    xf = jnp.transpose(x.reshape(B, C, H * W), (0, 2, 1)).reshape(-1, C).astype(jnp.float32)
    tf = jnp.transpose(target.reshape(B, C, H * W), (0, 2, 1)).reshape(-1, C).astype(jnp.float32)
    norm = jnp.sqrt(jnp.sum(xf * xf, axis=1, keepdims=True))
    p = xf / norm
    pt = tf * p + (1.0 - tf) * (1.0 - p)
    loss = -_pow_gamma(1.0 - pt, gamma) * jnp.log(pt)
    loss = jnp.where(jnp.isnan(loss) | jnp.isinf(loss), 0.0, loss)
    per_row = jnp.sum(loss, axis=1)
    return jnp.mean(per_row) if size_average else jnp.sum(per_row)


if __name__ == "__main__":
    key = jax.random.PRNGKey(0)
    k1, k2 = jax.random.split(key)

    B, C, H, W = 2, 4, 16, 16
    x = jax.random.normal(k1, (B, C, H, W), dtype=jnp.float32)
    # per-pixel class labels, and the equivalent one-hot NCHW target
    cls = jax.random.randint(k2, (B, H, W), 0, C)
    onehot = jnp.transpose(jax.nn.one_hot(cls, C, dtype=jnp.float32), (0, 3, 1, 2))

    # reference sees the same bf16-quantized x that the kernel consumes
    x_q = x.astype(jnp.bfloat16).astype(jnp.float32)

    for size_avg in (True, False):
        ref = _reference(x_q, onehot, gamma=2.0, size_average=size_avg)

        # fast path: int32 class-index target (least HBM traffic)
        out_idx = focal_loss_2d(x, cls, gamma=2.0, size_average=size_avg)
        out_idx = jax.block_until_ready(out_idx)
        assert jnp.allclose(out_idx, ref, rtol=5e-3, atol=1e-3), (out_idx, ref)

        # compatibility path: one-hot NCHW float target (cast to bf16 inside)
        out_oh = focal_loss_2d(x, onehot, gamma=2.0, size_average=size_avg)
        out_oh = jax.block_until_ready(out_oh)
        assert jnp.allclose(out_oh, ref, rtol=5e-3, atol=1e-3), (out_oh, ref)

    print("KERNEL_OK")
</pallas_src>

<mosaic_0001>
module attributes {stable_mosaic.version = 11 : i64} {
  func.func @focal_loss_kernel(%arg0: i32, %arg1: i32, %arg2: memref<1x4x256xbf16, #tpu.memory_space<vmem>>, %arg3: memref<1x1x256xi32, #tpu.memory_space<vmem>>, %arg4: memref<8x128xf32, #tpu.memory_space<vmem>>) attributes {dimension_semantics = [#tpu.dimension_semantics<parallel>, #tpu.dimension_semantics<parallel>], iteration_bounds = array<i64: 2, 1>, scalar_prefetch = 0 : i64, scratch_operands = 0 : i64, tpu.core_type = #tpu.core_type<tc>, window_params = [{transform_indices = @transform_0, window_bounds = array<i64: 1, 4, 256>}, {transform_indices = @transform_1, window_bounds = array<i64: 1, 1, 256>}, {transform_indices = @transform_2, window_bounds = array<i64: 8, 128>}]} {
    %c0 = arith.constant 0 : index
    %c0_0 = arith.constant 0 : index
    %c0_1 = arith.constant 0 : index
    %0 = vector.load %arg2[%c0, %c0_0, %c0_1] : memref<1x4x256xbf16, #tpu.memory_space<vmem>>, vector<1x4x256xbf16>
    %1 = vector.shape_cast %0 : vector<1x4x256xbf16> to vector<4x256xbf16>
    %2 = arith.extf %1 : vector<4x256xbf16> to vector<4x256xf32>
    %c0_2 = arith.constant 0 : index
    %c0_3 = arith.constant 0 : index
    %c0_4 = arith.constant 0 : index
    %3 = vector.load %arg3[%c0_2, %c0_3, %c0_4] : memref<1x1x256xi32, #tpu.memory_space<vmem>>, vector<1x1x256xi32>
    %4 = vector.shape_cast %3 : vector<1x1x256xi32> to vector<1x256xi32>
    %5 = tpu.iota {dimensions = array<i32: 0>} : vector<4x256xi32>
    %6 = vector.broadcast %4 : vector<1x256xi32> to vector<4x256xi32>
    %7 = arith.cmpi eq, %5, %6 : vector<4x256xi32>
    %8 = arith.extui %7 : vector<4x256xi1> to vector<4x256xi32>
    %9 = arith.sitofp %8 : vector<4x256xi32> to vector<4x256xf32>
    %10 = arith.mulf %2, %2 : vector<4x256xf32>
    %cst = arith.constant dense<0.000000e+00> : vector<256xf32>
    %11 = vector.multi_reduction <add>, %10, %cst [0] : vector<4x256xf32> to vector<256xf32>
    %12 = vector.shape_cast %11 : vector<256xf32> to vector<1x256xf32>
    %13 = math.rsqrt %12 : vector<1x256xf32>
    %14 = vector.broadcast %13 : vector<1x256xf32> to vector<4x256xf32>
    %15 = arith.mulf %2, %14 : vector<4x256xf32>
    %cst_5 = arith.constant 1.000000e+00 : f32
    %16 = vector.broadcast %cst_5 : f32 to vector<4x256xf32>
    %17 = arith.subf %16, %9 : vector<4x256xf32>
    %cst_6 = arith.constant 2.000000e+00 : f32
    %18 = vector.broadcast %cst_6 : f32 to vector<4x256xf32>
    %19 = arith.mulf %18, %9 : vector<4x256xf32>
    %cst_7 = arith.constant 1.000000e+00 : f32
    %20 = vector.broadcast %cst_7 : f32 to vector<4x256xf32>
    %21 = arith.subf %19, %20 : vector<4x256xf32>
    %22 = arith.mulf %21, %15 : vector<4x256xf32>
    %23 = arith.addf %17, %22 : vector<4x256xf32>
    %24 = math.log %23 : vector<4x256xf32>
    %cst_8 = arith.constant 1.000000e+00 : f32
    %25 = vector.broadcast %cst_8 : f32 to vector<4x256xf32>
    %26 = arith.subf %25, %23 : vector<4x256xf32>
    %27 = arith.mulf %26, %26 : vector<4x256xf32>
    %cst_9 = arith.constant 0.000000e+00 : f32
    %28 = vector.broadcast %cst_9 : f32 to vector<4x256xf32>
    %29 = arith.subf %28, %27 : vector<4x256xf32>
    %30 = arith.mulf %29, %24 : vector<4x256xf32>
    %31 = tpu.iota {dimensions = array<i32: 1>} : vector<4x256xi32>
    %c256_i32 = arith.constant 256 : i32
    %32 = arith.muli %arg1, %c256_i32 : i32
    %33 = vector.broadcast %32 : i32 to vector<4x256xi32>
    %34 = arith.addi %33, %31 : vector<4x256xi32>
    %c256_i32_10 = arith.constant 256 : i32
    %35 = vector.broadcast %c256_i32_10 : i32 to vector<4x256xi32>
    %36 = arith.cmpi slt, %34, %35 : vector<4x256xi32>
    %37 = arith.cmpf one, %30, %30 : vector<4x256xf32>
    %38 = math.absf %30 : vector<4x256xf32>
    %cst_11 = arith.constant 0x7F800000 : f32
    %39 = vector.broadcast %cst_11 : f32 to vector<4x256xf32>
    %40 = arith.cmpf oeq, %38, %39 : vector<4x256xf32>
    %41 = arith.ori %37, %40 : vector<4x256xi1>
    %cst_12 = arith.constant dense<true> : vector<4x256xi1>
    %42 = arith.xori %41, %cst_12 : vector<4x256xi1>
    %43 = arith.andi %36, %42 : vector<4x256xi1>
    %cst_13 = arith.constant 0.000000e+00 : f32
    %44 = vector.broadcast %cst_13 : f32 to vector<4x256xf32>
    %45 = arith.select %43, %30, %44 : vector<4x256xi1>, vector<4x256xf32>
    %46 = vector.shape_cast %45 : vector<4x256xf32> to vector<1x4x256xf32>
    %cst_14 = arith.constant dense<0.000000e+00> : vector<1xf32>
    %47 = vector.multi_reduction <add>, %46, %cst_14 [1, 2] : vector<1x4x256xf32> to vector<1xf32>
    %48 = vector.shape_cast %47 : vector<1xf32> to vector<1x1x1xf32>
    %49 = vector.extract %48[0, 0, 0] : f32 from vector<1x1x1xf32>
    %50 = vector.broadcast %49 : f32 to vector<8x128xf32>
    %c0_15 = arith.constant 0 : index
    %c0_16 = arith.constant 0 : index
    %51 = vector.load %arg4[%c0_15, %c0_16] : memref<8x128xf32, #tpu.memory_space<vmem>>, vector<8x128xf32>
    tpu.vector_store %arg4[%c0_15, %c0_16], %50 {strides = array<i32>} : memref<8x128xf32, #tpu.memory_space<vmem>>, vector<8x128xf32>,
    return
  }
  func.func @transform_0(%arg0: i32, %arg1: i32) -> (i32, i32, i32) {
    %c0_i32 = arith.constant 0 : i32
    %c0_i32_0 = arith.constant 0 : i32
    return %arg0, %c0_i32, %arg1 : i32, i32, i32
  }
  func.func @transform_1(%arg0: i32, %arg1: i32) -> (i32, i32, i32) {
    %c0_i32 = arith.constant 0 : i32
    %c0_i32_0 = arith.constant 0 : i32
    return %arg0, %c0_i32, %arg1 : i32, i32, i32
  }
  func.func @transform_2(%arg0: i32, %arg1: i32) -> (i32, i32) {
    %c0_i32 = arith.constant 0 : i32
    return %arg0, %arg1 : i32, i32
  }
}

</mosaic_0001>

<llo_original>
// kernel: tpu_custom_call.1
$region0: #{tpu_custom_call.1}
  #allocation0 [shape = 'u32[]', space=smem, size = 0x4, offset = 0x4, fixed_abs, tag = 'smem constant byte address 0x4 - core index']
  #allocation1 [shape = 'u32[72,128]{1,0:T(1,128)}', space=vmem, size = 0x9000, scoped, tag = 'internal scratch']
  %s0 = inlined_call_operand.hbm [shape: bf16[2,4,256], index: 0, kind: input, shape index: {}]
  %s1 = inlined_call_operand.hbm [shape: s32[2,1,256], index: 1, kind: input, shape index: {}]
  %s2 = inlined_call_operand.hbm [shape: f32[16,128], index: 2, kind: output, shape index: {}]
  %s3 = sld [smem:[#allocation0]]
  $region49: #{tpu_custom_call.1} parent=0
    _
  %s5 = ssub.s32 1, %s3
  %s6 = scalar_select 0, %s5, %s3
  $region1: #{tpu_custom_call.1} parent=0
    #allocation2 [shape = 'u8[4096]{0}', space=vmem, size = 0x1000, scoped, tag = 'input window, operand 0']
    #allocation3 [shape = 's32[2]{0}', space=sflag, size = 0x8, scoped, tag = 'scoped memory for tpu_custom_call.1']
    #allocation4 [shape = 's32[2]{0}', space=sflag, size = 0x8, scoped, tag = 'scoped memory for tpu_custom_call.1']
    #allocation5 [shape = 'u8[2048]{0}', space=vmem, size = 0x800, scoped, tag = 'input window, operand 1']
    #allocation6 [shape = 's32[2]{0}', space=sflag, size = 0x8, scoped, tag = 'scoped memory for tpu_custom_call.1']
    #allocation7 [shape = 'u8[8192]{0}', space=vmem, size = 0x2000, scoped, tag = 'output window, operand 0']
    %7 = vsyncpa [#allocation3], 0
    %s8 = scalar_lea.sflag [#allocation3], 1
    %9 = vsyncpa %s8, 0
    %10 = vsyncpa [#allocation6], 0
    %s11 = scalar_lea.sflag [#allocation6], 1
    %12 = vsyncpa %s11, 0
    %13 = vsyncpa [#allocation4], 0
    %s14 = scalar_lea.sflag [#allocation4], 1
    %15 = vsyncpa %s14, 0
    loop: start=0, step=1, limit=4
    $region2: #{tpu_custom_call.1} parent=1 // loop_pre_header
      _
    $region3: #{tpu_custom_call.1} parent=1 // loop_header
      %s17 = sphi 0, %s21
      %p18 = scmp.ge.s32.totalorder %s17, 4
      %s24 = sphi 0, %s36
      %s25 = sphi 0, %s32
      %s26 = sphi 0, %s24
      %s27 = sphi 0, %s25
      %s28 = sphi 0, %s26
      %s29 = sphi 0, %s27
      %s41 = sphi 0, %s43
      %s44 = sphi 0, %s41
      %s45 = sphi 0, %s44
      %s61 = sphi 0, %s45
      %s69 = sphi 0, %s71
      %s72 = sphi 0, %s69
      %s73 = sphi 0, %s72
      %s89 = sphi 0, %s73
      %s97 = sphi 0, %s99
      %s100 = sphi 0, %s97
      %s101 = sphi 0, %s100
      %s117 = sphi 0, %s101
    $region4: #{tpu_custom_call.1} parent=1 // loop_header_branch
      %20 = sbr.rel (%p18) target = $region8
    $region5: #{tpu_custom_call.1} parent=1 // loop_body
      %s22 = ssub.s32 %s17, 1
      %s23 = ssub.s32 %s17, 2
      %s30 = sadd.s32 1, %s25
      %p31 = scmp.ge.s32.totalorder %s30, 1
      %s32 = scalar_select %p31, 0, %s30
      %s33 = sadd.s32 1, %s24
      %s34 = scalar_select %p31, %s33, %s24
      %p35 = scmp.ge.s32.totalorder %s34, 2
      %s36 = scalar_select %p35, 0, %s34
      %s37 = ssub.s32 %s24, %s36
      %s38 = ssub.s32 %s25, %s32
      %s39 = sor.u32 %s37, %s38
      %p40 = scmp.eq.s32.totalorder %s39, 0
      %s42 = sadd.s32 %s41, 1
      %s43 = scalar_select %p40, %s41, %s42
      %p46 = pneg %p40
      %p47 = scmp.eq.s32.totalorder %s17, 1
      %p48 = por %p46, %p47
      %p49 = scmp.ne.s32.totalorder %s41, %s44
      %p50 = scmp.eq.s32.totalorder %s17, 0
      %p51 = por %p49, %p50
      %p52 = scmp.ne.s32.totalorder %s41, %s44
      %p53 = scmp.eq.s32.totalorder %s22, 1
      %p54 = por %p52, %p53
      %p55 = scmp.ne.s32.totalorder %s44, %s45
      %p56 = scmp.eq.s32.totalorder %s22, 0
      %p57 = por %p55, %p56
      %p58 = scmp.ne.s32.totalorder %s44, %s45
      %p59 = scmp.eq.s32.totalorder %s23, 1
      %p60 = por %p58, %p59
      %p62 = scmp.ne.s32.totalorder %s45, %s61
      %p63 = scmp.eq.s32.totalorder %s23, 0
      %p64 = por %p62, %p63
      %s65 = ssub.s32 %s24, %s36
      %s66 = ssub.s32 %s25, %s32
      %s67 = sor.u32 %s65, %s66
      %p68 = scmp.eq.s32.totalorder %s67, 0
      %s70 = sadd.s32 %s69, 1
      %s71 = scalar_select %p68, %s69, %s70
      %p74 = pneg %p68
      %p75 = scmp.eq.s32.totalorder %s17, 1
      %p76 = por %p74, %p75
      %p77 = scmp.ne.s32.totalorder %s69, %s72
      %p78 = scmp.eq.s32.totalorder %s17, 0
      %p79 = por %p77, %p78
      %p80 = scmp.ne.s32.totalorder %s69, %s72
      %p81 = scmp.eq.s32.totalorder %s22, 1
      %p82 = por %p80, %p81
      %p83 = scmp.ne.s32.totalorder %s72, %s73
      %p84 = scmp.eq.s32.totalorder %s22, 0
      %p85 = por %p83, %p84
      %p86 = scmp.ne.s32.totalorder %s72, %s73
      %p87 = scmp.eq.s32.totalorder %s23, 1
      %p88 = por %p86, %p87
      %p90 = scmp.ne.s32.totalorder %s73, %s89
      %p91 = scmp.eq.s32.totalorder %s23, 0
      %p92 = por %p90, %p91
      %s93 = ssub.s32 %s24, %s36
      %s94 = ssub.s32 %s25, %s32
      %s95 = sor.u32 %s93, %s94
      %p96 = scmp.eq.s32.totalorder %s95, 0
      %s98 = sadd.s32 %s97, 1
      %s99 = scalar_select %p96, %s97, %s98
      %p102 = pneg %p96
      %p103 = scmp.eq.s32.totalorder %s17, 1
      %p104 = por %p102, %p103
      %p105 = scmp.ne.s32.totalorder %s97, %s100
      %p106 = scmp.eq.s32.totalorder %s17, 0
      %p107 = por %p105, %p106
      %p108 = scmp.ne.s32.totalorder %s97, %s100
      %p109 = scmp.eq.s32.totalorder %s22, 1
      %p110 = por %p108, %p109
      %p111 = scmp.ne.s32.totalorder %s100, %s101
      %p112 = scmp.eq.s32.totalorder %s22, 0
      %p113 = por %p111, %p112
      %p114 = scmp.ne.s32.totalorder %s100, %s101
      %p115 = scmp.eq.s32.totalorder %s23, 1
      %p116 = por %p114, %p115
      %p118 = scmp.ne.s32.totalorder %s101, %s117
      %p119 = scmp.eq.s32.totalorder %s23, 0
      %p120 = por %p118, %p119
      %p121 = scmp.le.s32.totalorder 1, %s17
      %p122 = scmp.lt.s32.totalorder %s17, 3
      %p123 = pnand %p121, %p122
      %p124 = pneg %p123
      // Predicated region
      $region9: #{tpu_custom_call.1} parent=5 // pred_check
        _
      $region10: #{tpu_custom_call.1} parent=5 // pred_check_branch
        %126 = sbr.rel (%p123) target = $region12
      $region11: #{tpu_custom_call.1} parent=5 // pred_region
        %s127 = ssub.s32 %s17, 1
      $region12: #{tpu_custom_call.1} parent=5 // pred_fallthru
        _
      %p128 = scmp.lt.s32.totalorder %s17, 2
      // Predicated region
      $region13: #{tpu_custom_call.1} parent=5 // pred_check
        %p129 = pneg %p128
      $region14: #{tpu_custom_call.1} parent=5 // pred_check_branch
        %131 = sbr.rel (%p129) target = $region16
      $region15: #{tpu_custom_call.1} parent=5 // pred_region
        // Predicated region
        $region17: #{tpu_custom_call.1} parent=15 // pred_check
          %p132 = pneg %p51
        $region18: #{tpu_custom_call.1} parent=15 // pred_check_branch
          %134 = sbr.rel (%p132) target = $region20
        $region19: #{tpu_custom_call.1} parent=15 // pred_region
          %s135 = sand.u32 %s41, 1
          %s136 = scalar_lea.sflag [#allocation3], %s135
          %s137 = sand.u32 %s41, 1
          %s138 = smul.addr %s137, 4
          %s139 = scalar_lea.vmem [#allocation2], %s138
          %s140 = smul.u32 2, %s25
          %142 = vsyncadd %s136, 0
          %s143 = smul.addr %s24, 2
          %s144 = sadd.s32 %s140, %s143
          %s145 = smul.addr %s144, 2
          %s146 = scalar_lea.hbm %s0, %s145
          %s148 = sshll.u32 %s146, 4
          %s149 = int_to_ptr.hbm [resolvable:$true] %s148
          %s150 = sshll.u32 %s139, 4
          %s151 = int_to_ptr.vmem [resolvable:$true] %s150
          %153 = dma.hbm_to_vmem [thread:$0]  %s149, 64, %s151, %s136
        $region20: #{tpu_custom_call.1} parent=15 // pred_fallthru
          _
        // Predicated region
        $region21: #{tpu_custom_call.1} parent=15 // pred_check
          %p154 = pneg %p79
        $region22: #{tpu_custom_call.1} parent=15 // pred_check_branch
          %156 = sbr.rel (%p154) target = $region24
        $region23: #{tpu_custom_call.1} parent=15 // pred_region
          %s157 = sand.u32 %s69, 1
          %s158 = scalar_lea.sflag [#allocation6], %s157
          %s159 = sand.u32 %s69, 1
          %s160 = smul.addr %s159, 2
          %s161 = scalar_lea.vmem [#allocation5], %s160
          %s162 = smul.u32 2, %s25
          %164 = vsyncadd %s158, 0
          %s165 = smul.addr %s24, 2
          %s166 = sadd.s32 %s162, %s165
          %s167 = scalar_lea.hbm %s1, %s166
          %s169 = sshll.u32 %s167, 4
          %s170 = int_to_ptr.hbm [resolvable:$true] %s169
          %s171 = sshll.u32 %s161, 4
          %s172 = int_to_ptr.vmem [resolvable:$true] %s171
          %174 = dma.hbm_to_vmem [thread:$0]  %s170, 32, %s172, %s158
        $region24: #{tpu_custom_call.1} parent=15 // pred_fallthru
          _
      $region16: #{tpu_custom_call.1} parent=5 // pred_fallthru
        _
      %p175 = scmp.le.s32.totalorder 1, %s17
      %p176 = scmp.lt.s32.totalorder %s17, 3
      %p177 = pnand %p175, %p176
      %p178 = pneg %p177
      // Predicated region
      $region25: #{tpu_custom_call.1} parent=5 // pred_check
        _
      $region26: #{tpu_custom_call.1} parent=5 // pred_check_branch
        %180 = sbr.rel (%p177) target = $region28
      $region27: #{tpu_custom_call.1} parent=5 // pred_region
        %s181 = ssub.s32 %s17, 1
        %s182 = sand.u32 %s44, 1
        %s183 = scalar_lea.sflag [#allocation3], %s182
        %s184 = sand.u32 %s44, 1
        %s185 = smul.addr %s184, 4
        %s186 = scalar_lea.vmem [#allocation2], %s185
        // Predicated region
        $region29: #{tpu_custom_call.1} parent=27 // pred_check
          %p187 = pneg %p57
        $region30: #{tpu_custom_call.1} parent=27 // pred_check_branch
          %189 = sbr.rel (%p187) target = $region32
        $region31: #{tpu_custom_call.1} parent=27 // pred_region
          %191 = dma.done %s183, 64
        $region32: #{tpu_custom_call.1} parent=27 // pred_fallthru
          _
        %s192 = sand.u32 %s72, 1
        %s193 = scalar_lea.sflag [#allocation6], %s192
        %s194 = sand.u32 %s72, 1
        %s195 = smul.addr %s194, 2
        %s196 = scalar_lea.vmem [#allocation5], %s195
        // Predicated region
        $region33: #{tpu_custom_call.1} parent=27 // pred_check
          %p197 = pneg %p85
        $region34: #{tpu_custom_call.1} parent=27 // pred_check_branch
          %199 = sbr.rel (%p197) target = $region36
        $region35: #{tpu_custom_call.1} parent=27 // pred_region
          %201 = dma.done %s193, 32
        $region36: #{tpu_custom_call.1} parent=27 // pred_fallthru
          _
        %s202 = sand.u32 %s44, 1
        %s203 = scalar_lea.sflag [#allocation3], %s202
        %s204 = sand.u32 %s44, 1
        %s205 = smul.addr %s204, 4
        %s206 = scalar_lea.vmem [#allocation2], %s205
        %p207 = pneg %p57
        %p208 = pneg %p54
        %s209 = sand.u32 %s72, 1
        %s210 = scalar_lea.sflag [#allocation6], %s209
        %s211 = sand.u32 %s72, 1
        %s212 = smul.addr %s211, 2
        %s213 = scalar_lea.vmem [#allocation5], %s212
        %p214 = pneg %p85
        %p215 = pneg %p82
        %p216 = pneg %p113
        %p217 = pneg %p110
        %s218 = sand.u32 %s100, 1
        %s219 = scalar_lea.sflag [#allocation4], %s218
        %s220 = sand.u32 %s100, 1
        %s221 = smul.addr %s220, 8
        %s222 = scalar_lea.vmem [#allocation7], %s221
        %s223 = smul.u32 2, %s27
        %s224 = smul.u32 2, %s27
        %v225 = vld [vmem:[%s186] sm:$0xf]
        %v226 = vunpack.c.l.bf16 %v225
        %v227 = vld [vmem:[%s196] sm:$0x3]
        %v228 = vlaneseq
        %v229 = vshrl.u32 %v228, 7
        %v230 = vperm.slane %v227, 0
        %v231 = vperm.slane %v227, 1
        %vm232 = vcmp.eq.s32.totalorder %v229, %v230
        %vm233 = vcmp.eq.s32.totalorder %v229, %v231
        %v234 = vsel %vm232, 1, 0
        %v235 = vsel %vm233, 1, 0
        %v236 = vcvt.s32.f32 %v234
        %v237 = vcvt.s32.f32 %v235
        %v238 = vmul.f32 %v226, %v226
        %240 = vst [vmem:[#allocation1] ss:$2 sm:$0xff] %v238
        %v241 = vld.sshfl [vmem:[#allocation1] sm:$0xff pattern:$0x75316420]
        %v242 = vld.sshfl [vmem:[#allocation1 + $0x8] sm:$0xff pattern:$0x75316420]
        %vm245 = vcmask 1043456
        %v246 = vsel %vm245, %v241, 0.0
        %v247 = vrot.slane %v246, 4
        %v248 = vadd.f32 %v246, %v247
        %v249 = vrot.slane %v248, 2
        %v250 = vadd.f32 %v248, %v249
        %v251 = vrot.slane %v250, 1
        %v252 = vadd.f32 %v250, %v251
        %v253 = vsel %vm245, %v242, 0.0
        %v254 = vrot.slane %v253, 4
        %v255 = vadd.f32 %v253, %v254
        %v256 = vrot.slane %v255, 2
        %v257 = vadd.f32 %v255, %v256
        %v258 = vrot.slane %v257, 1
        %v259 = vadd.f32 %v257, %v258
        %v260 = vrsqrt.pop %v252
        %v261 = vmul.f32 %v260, %v252
        %v262 = vmul.f32 %v261, %v260
        %v263 = vmul.f32 0.5, %v262
        %v264 = vsub.f32 1.5, %v263
        %v265 = vmul.f32 %v260, %v264
        %vm266 = vweird.f32 %v252
        %vm267 = vweird.f32 %v260
        %vm268 = vmor %vm266, %vm267
        %v269 = vsel %vm268, %v260, %v265
        %v270 = vrsqrt.pop %v259
        %v271 = vmul.f32 %v270, %v259
        %v272 = vmul.f32 %v271, %v270
        %v273 = vmul.f32 0.5, %v272
        %v274 = vsub.f32 1.5, %v273
        %v275 = vmul.f32 %v270, %v274
        %vm276 = vweird.f32 %v259
        %vm277 = vweird.f32 %v270
        %vm278 = vmor %vm276, %vm277
        %v279 = vsel %vm278, %v270, %v275
        %v282 = vrot.slane %v279, 4
        %v283 = vsel %vm245, %v269, %v282
        %v285 = vmul.f32 %v226, %v283
        %v286 = vsub.f32 1.0, %v236
        %v287 = vsub.f32 1.0, %v237
        %v288 = vmul.f32 %v236, 2.0
        %v289 = vmul.f32 %v237, 2.0
        %v290 = vsub.f32 %v288, 1.0
        %v291 = vsub.f32 %v289, 1.0
        %293 = vst [vmem:[#allocation1] ss:$2 sm:$0xff] %v285
        %v294 = vld.sshfl [vmem:[#allocation1] sm:$0xff pattern:$0x75316420]
        %v295 = vld.sshfl [vmem:[#allocation1 + $0x8] sm:$0xff pattern:$0x75316420]
        %v298 = vmul.f32 %v290, %v294
        %v299 = vmul.f32 %v291, %v295
        %v300 = vadd.f32 %v286, %v298
        %v301 = vadd.f32 %v287, %v299
        %v302 = vlog2.pop %v300
        %v303 = vmul.f32 %v302, 0.6931472
        %v304 = vlog2.pop %v301
        %v305 = vmul.f32 %v304, 0.6931472
        %v306 = vsub.f32 1.0, %v300
        %v307 = vsub.f32 1.0, %v301
        %v308 = vmul.f32 %v306, %v306
        %v309 = vmul.f32 %v307, %v307
        %v310 = vsub.f32 0.0, %v308
        %v311 = vsub.f32 0.0, %v309
        %v312 = vmul.f32 %v310, %v303
        %v313 = vmul.f32 %v311, %v305
        %v314 = vlaneseq
        %v315 = vand.u32 %v314, 127
        %v316 = vadd.s32 %v315, 128
        %s317 = smul.u32 %s27, 256
        %v318 = vstv %s317
        %v319 = vadd.s32 %v318, %v315
        %v320 = vadd.s32 %v318, %v316
        %vm321 = vcmp.lt.s32.totalorder %v319, 256
        %vm322 = vcmp.lt.s32.totalorder %v320, 256
        %vm323 = vcmp.ne.f32.partialorder %v312, %v312
        %vm324 = vcmp.ne.f32.partialorder %v313, %v313
        %v325 = vand.u32 2147483647, %v312
        %v326 = vand.u32 2147483647, %v313
        %vm327 = vcmp.eq.f32.partialorder %v325, inf
        %vm328 = vcmp.eq.f32.partialorder %v326, inf
        %vm329 = vmor %vm323, %vm327
        %vm330 = vmor %vm324, %vm328
        %vm331 = vmxor %vm329, 1
        %vm332 = vmxor %vm330, 1
        %vm333 = vmand %vm321, %vm331
        %vm334 = vmand %vm322, %vm332
        %v335 = vsel %vm333, %v312, 0.0
        %v336 = vsel %vm334, %v313, 0.0
        %v337 = vsel %vm245, %v335, 0.0
        %v338 = vsel %vm245, %v336, 0.0
        %v339 = vadd.f32 %v337, %v338
        %340 = vadd.xlane.f32.xlu0 %v339
        %v341 = vpop.xlane.xlu0 %340
        %v342 = vrot.slane %v341, 4
        %v343 = vadd.f32 %v341, %v342
        %v344 = vrot.slane %v343, 2
        %v345 = vadd.f32 %v343, %v344
        %v346 = vrot.slane %v345, 1
        %v347 = vadd.f32 %v345, %v346
        %s348 = vtos %v347
        %v349 = vstv %s348
        %350 = vst [vmem:[%s222] sm:$0xff] %v349
        %s351 = sand.u32 %s100, 1
        %s352 = scalar_lea.sflag [#allocation4], %s351
        %s353 = sand.u32 %s100, 1
        %s354 = smul.addr %s353, 8
        %s355 = scalar_lea.vmem [#allocation7], %s354
        // Predicated region
        $region37: #{tpu_custom_call.1} parent=27 // pred_check
          %p356 = pneg %p110
        $region38: #{tpu_custom_call.1} parent=27 // pred_check_branch
          %358 = sbr.rel (%p356) target = $region40
        $region39: #{tpu_custom_call.1} parent=27 // pred_region
          %360 = vsyncadd %s352, 0
          %s361 = sadd.s32 %s27, %s26
          %s362 = smul.addr %s361, 8
          %s363 = scalar_lea.hbm %s2, %s362
          %s365 = sshll.u32 %s355, 4
          %s366 = int_to_ptr.vmem [resolvable:$true] %s365
          %s367 = sshll.u32 %s363, 4
          %s368 = int_to_ptr.hbm [resolvable:$true] %s367
          %370 = dma.vmem_to_hbm [thread:$0]  %s366, 128, %s368, %s352
        $region40: #{tpu_custom_call.1} parent=27 // pred_fallthru
          _
      $region28: #{tpu_custom_call.1} parent=5 // pred_fallthru
        _
      %p371 = scmp.le.s32.totalorder 2, %s17
      // Predicated region
      $region41: #{tpu_custom_call.1} parent=5 // pred_check
        %p372 = pneg %p371
      $region42: #{tpu_custom_call.1} parent=5 // pred_check_branch
        %374 = sbr.rel (%p372) target = $region44
      $region43: #{tpu_custom_call.1} parent=5 // pred_region
        %s375 = ssub.s32 %s17, 2
        // Predicated region
        $region45: #{tpu_custom_call.1} parent=43 // pred_check
          %p376 = pneg %p116
        $region46: #{tpu_custom_call.1} parent=43 // pred_check_branch
          %378 = sbr.rel (%p376) target = $region48
        $region47: #{tpu_custom_call.1} parent=43 // pred_region
          %s379 = sand.u32 %s101, 1
          %s380 = scalar_lea.sflag [#allocation4], %s379
          %s381 = sand.u32 %s101, 1
          %s382 = smul.addr %s381, 8
          %s383 = scalar_lea.vmem [#allocation7], %s382
          %385 = dma.done %s380, 128
        $region48: #{tpu_custom_call.1} parent=43 // pred_fallthru
          _
      $region44: #{tpu_custom_call.1} parent=5 // pred_fallthru
        _
    $region6: #{tpu_custom_call.1} parent=1 // loop_footer
      %s21 = sadd.s32 1, %s17
    $region7: #{tpu_custom_call.1} parent=1 // loop_footer_branch
      %16 = sbr.rel target = $region3
    $region8: #{tpu_custom_call.1} parent=1 // loop_exit
      _
    %386 = vsyncpa [#allocation3], 1
    %s387 = scalar_lea.sflag [#allocation3], 1
    %388 = vsyncpa %s387, 1
    %389 = vsyncpa [#allocation6], 1
    %s390 = scalar_lea.sflag [#allocation6], 1
    %391 = vsyncpa %s390, 1
    %392 = vsyncpa [#allocation4], 1
    %s393 = scalar_lea.sflag [#allocation4], 1
    %394 = vsyncpa %s393, 1

</llo_original>
